<compile_context>
chip_gen: v7x
topology: tpu7x:2x2x1
jax: 0.10.0
libtpu: 0.0.40
codegen_flags: <defaults>
</compile_context>

<pallas_src>
import functools

import numpy as np
import jax
import jax.numpy as jnp
from jax import lax
from jax.experimental import pallas as pl
from jax.experimental.pallas import tpu as pltpu


# --------------------------------------------------------------------------- helpers

def _vmem_limit_bytes():
    """Generation-aware VMEM limit: ~40 MiB on v7x (64 MiB phys), ~100 MiB on v5e/v6e."""
    try:
        cap = int(pltpu.get_tpu_info().vmem_capacity_bytes)
    except Exception:
        cap = 64 * 1024 * 1024
    return int(min(100 * 1024 * 1024, max(32 * 1024 * 1024, cap - 24 * 1024 * 1024)))


def _pick_td(d, target=32):
    """Largest depth tile <= target that is a multiple of 8 and divides D."""
    if d % 8 != 0:
        return d                       # single un-tiled block (block == full dim)
    td = max(8, min(target, d) - (min(target, d) % 8))
    while d % td:
        td -= 8
    return td


def _depth_halo(x, td, r, fill):
    """(..., D, HW) -> (..., ndt, 2r, HW): +-r depth rows around each tile, `fill` outside."""
    d = x.shape[-2]
    ndt = d // td
    pad = jnp.full(x.shape[:-2] + (r, x.shape[-1]), fill, x.dtype)
    tiles = []
    for di in range(ndt):
        lo = di * td
        top = pad if di == 0 else lax.slice_in_dim(x, lo - r, lo, axis=-2)
        bot = pad if di == ndt - 1 else lax.slice_in_dim(x, lo + td, lo + td + r, axis=-2)
        tiles.append(jnp.concatenate([top, bot], axis=-2))
    return jnp.stack(tiles, axis=-3)


# ------------------------------------------------------------------ in-kernel helpers

def _load_masks(mask_ref, r):
    """Precomputed f32 0/1 W/H validity masks, each (1, HW)."""
    wf = [mask_ref[o - 1:o, :] for o in range(1, r + 1)]
    wb = [mask_ref[r + o - 1:r + o, :] for o in range(1, r + 1)]
    hf = [mask_ref[2 * r + o - 1:2 * r + o, :] for o in range(1, r + 1)]
    hb = [mask_ref[3 * r + o - 1:3 * r + o, :] for o in range(1, r + 1)]
    return wf, wb, hf, hb


def _sum_pool_hw(x, masks, r, W, HW, cw=0.0, ch=0.0):
    """Separable (2r+1)^2 window sum over the fused H*W axis of x (rows, HW).

    Out-of-image window cells contribute `cw` (W pass); a fully out-of-image
    W-window contributes `ch` (H pass).  cw=ch=0 is AvgPool3d's zero padding."""
    wf, wb, hf, hb = masks
    acc = x
    for o in range(1, r + 1):
        mf, mb = wf[o - 1], wb[o - 1]
        fterm = pltpu.roll(x, HW - o, axis=1) * mf
        bterm = pltpu.roll(x, o, axis=1) * mb
        if cw != 0.0:
            fterm = fterm + cw * (1.0 - mf)
            bterm = bterm + cw * (1.0 - mb)
        acc = acc + fterm + bterm
    y = acc
    for o in range(1, r + 1):
        mf, mb = hf[o - 1], hb[o - 1]
        fterm = pltpu.roll(acc, HW - o * W, axis=1) * mf
        bterm = pltpu.roll(acc, o * W, axis=1) * mb
        if ch != 0.0:
            fterm = fterm + ch * (1.0 - mf)
            bterm = bterm + ch * (1.0 - mb)
        y = y + fterm + bterm
    return y


def _halo_pool_add(pooled, halo_ref, masks, TD, r, W, HW, cw=0.0, ch=0.0):
    """Add the W/H-pooled +-r depth-halo rows to the banded depth sum."""
    row = lax.broadcasted_iota(jnp.int32, (TD, 1), 0)
    for k in range(r):
        top = _sum_pool_hw(halo_ref[k:k + 1, :], masks, r, W, HW, cw, ch)
        bot = _sum_pool_hw(halo_ref[r + k:r + k + 1, :], masks, r, W, HW, cw, ch)
        pooled = pooled + jnp.where(row <= k, top, 0.0)
        pooled = pooled + jnp.where(row >= TD - r + k, bot, 0.0)
    return pooled


# --------------------------------------------------------------------------- kernel

def _ce_kernel(*refs, C, W, HW, TD, r, pool, bwf, eps, scale, has_weights,
               one_hot, bnd_per_channel, bnd_once, has_acc2):
    use_boundary = bnd_per_channel or bnd_once
    it = iter(refs)
    w_ref = next(it) if has_weights else None            # (C,) f32 SMEM
    pred_ref = next(it)                                   # (TD, HW)
    ipsum_ref = next(it) if scale else None               # (TD, HW) 1/sum_c pred
    label_ref = next(it)                                   # (TD, HW)
    lhalo_ref = next(it) if bnd_per_channel else None      # (2r, HW)
    lidx_ref = next(it) if bnd_once else None               # (TD, HW) label index (f32)
    lidx_halo_ref = next(it) if bnd_once else None           # (2r, HW), -1 outside volume
    mask_ref = next(it) if use_boundary else None             # (4r, HW)
    bdc_ref = next(it) if use_boundary else None               # (TD, TD) banded depth matrix
    out_ref = next(it)                                           # (TD, HW) output/accumulator
    acc2_ref = next(it) if has_acc2 else None                     # (TD, HW)
    accm_ref = next(it) if use_boundary else None                  # (TD, HW)

    c = pl.program_id(2)
    inv_pool3 = 1.0 / float(pool ** 3)

    @pl.when(c == 0)
    def _init():
        out_ref[...] = jnp.zeros_like(out_ref)
        if has_acc2:
            acc2_ref[...] = jnp.zeros_like(acc2_ref)
        if bnd_per_channel:
            accm_ref[...] = jnp.zeros_like(accm_ref)

    lab = label_ref[...]
    p = pred_ref[...]
    if scale:
        p = p * ipsum_ref[...]        # precomputed reciprocal -> vmul, not vdiv

    # ---- cross-entropy accumulation over the channel grid axis ----
    if one_hot:
        out_ref[...] += lab * p                       # p_true = sum_c t_c * p_c
        if has_weights:
            acc2_ref[...] += w_ref[c] * lab           # per-voxel class weight
    else:
        if scale:
            ce = -lab * jnp.log(jnp.maximum(p, eps))  # p <= 1 after normalization
        else:
            ce = -lab * jnp.log(jnp.clip(p, eps, 1.0))
        if has_weights:
            out_ref[...] += w_ref[c] * ce             # A = sum_c w_c * ce_c
            if bnd_per_channel:
                acc2_ref[...] += ce                   # B = sum_c ce_c (only if needed)
        else:
            out_ref[...] += ce

    # ---- boundary map, general (soft-label-safe) per-channel variant ----
    if bnd_per_channel:
        masks = _load_masks(mask_ref, r)
        tile_hw = _sum_pool_hw(lab, masks, r, W, HW)
        pooled = jnp.dot(bdc_ref[...], tile_hw, preferred_element_type=jnp.float32)
        pooled = _halo_pool_add(pooled, lhalo_ref, masks, TD, r, W, HW)
        avg = pooled * inv_pool3
        in_band = jnp.logical_and(avg >= eps, avg <= 1.0 - eps)
        accm_ref[...] = jnp.maximum(accm_ref[...], in_band.astype(jnp.float32))

    # ---- boundary map, one-hot fast variant: once per depth tile ----
    if bnd_once:
        @pl.when(c == 0)
        def _boundary_once():
            masks = _load_masks(mask_ref, r)
            n3 = float(pool ** 3)
            v = lidx_ref[...]                       # class index, -1 = padding sentinel
            # window sum of v (padding counts as -1) and of v^2 (padding counts as +1):
            s1 = jnp.dot(bdc_ref[...],
                         _sum_pool_hw(v, masks, r, W, HW, -1.0, -float(pool)),
                         preferred_element_type=jnp.float32)
            s1 = _halo_pool_add(s1, lidx_halo_ref, masks, TD, r, W, HW,
                                -1.0, -float(pool))
            v2 = v * v
            s2 = jnp.dot(bdc_ref[...],
                         _sum_pool_hw(v2, masks, r, W, HW, 1.0, float(pool)),
                         preferred_element_type=jnp.float32)
            # halo of v^2 == (halo of v)^2 is NOT loadable directly; square the rows:
            row = lax.broadcasted_iota(jnp.int32, (TD, 1), 0)
            for k in range(r):
                top = lidx_halo_ref[k:k + 1, :]
                bot = lidx_halo_ref[r + k:r + k + 1, :]
                top2 = _sum_pool_hw(top * top, masks, r, W, HW, 1.0, float(pool))
                bot2 = _sum_pool_hw(bot * bot, masks, r, W, HW, 1.0, float(pool))
                s2 = s2 + jnp.where(row <= k, top2, 0.0)
                s2 = s2 + jnp.where(row >= TD - r + k, bot2, 0.0)
            # window uniform and fully interior  <=>  mean == v and mean(sq) == v^2.
            uniform = jnp.logical_and(jnp.abs(s1 - n3 * v) < 0.5,
                                      jnp.abs(s2 - n3 * v2) < 0.5)
            accm_ref[...] = 1.0 - uniform.astype(jnp.float32)

    # ---- finalize on the last channel ----
    @pl.when(c == C - 1)
    def _finalize():
        inv_c = 1.0 / float(C)
        if one_hot:
            p_true = out_ref[...]
            if scale:
                nll = -jnp.log(jnp.maximum(p_true, eps))
            else:
                nll = -jnp.log(jnp.clip(p_true, eps, 1.0))
            coef = acc2_ref[...] if has_weights else 1.0
            if use_boundary:
                coef = coef + bwf * accm_ref[...]
            out_ref[...] = nll * coef * inv_c
        else:
            a = out_ref[...]
            if bnd_per_channel:
                b = acc2_ref[...] if has_weights else a
                out_ref[...] = (a + (bwf * accm_ref[...]) * b) * inv_c
            else:
                out_ref[...] = a * inv_c


# --------------------------------------------------------------------------- wrapper

def categorical_crossentropy_loss(y_pred, y_true, *, weights=None, scale=True,
                                  boundaries_weight_factor=None,
                                  boundaries_pool=None, epsilon=1e-7,
                                  one_hot_labels=False, label_indices=None,
                                  d_tile=None):
    y_pred = y_pred.astype(jnp.float32)
    y_true = y_true.astype(jnp.float32)
    n, c, d, h, w = y_pred.shape
    hw = h * w
    assert hw % 128 == 0, "fused H*W must be a multiple of 128 (lane-dense stores)"

    use_boundary = boundaries_weight_factor is not None
    has_weights = weights is not None
    one_hot = bool(one_hot_labels)
    eps = float(epsilon)
    if use_boundary:
        pool = int(boundaries_pool)
        assert pool % 2 == 1, "only odd boundaries_pool matches AvgPool3d pad=(pool-1)//2"
        bwf = float(boundaries_weight_factor)
        r = (pool - 1) // 2
    else:
        pool, bwf, r = 1, 0.0, 0

    # Exactly-one-hot labels + eps < 1/pool^3: the boundary map is channel independent
    # (window non-uniform or touching padding) -> compute it once per depth tile.
    bnd_once = use_boundary and one_hot and eps < 1.0 / float(pool ** 3)
    bnd_per_channel = use_boundary and not bnd_once
    has_acc2 = has_weights and (one_hot or bnd_per_channel)

    td = _pick_td(d) if d_tile is None else int(d_tile)
    assert d % td == 0 and (td % 8 == 0 or td == d), (d, td)
    assert r <= td, "boundaries_pool halo must fit inside one depth tile"
    ndt = d // td

    pred_f = y_pred.reshape(n, c, d, hw)
    label_f = y_true.reshape(n, c, d, hw)

    inputs, in_specs = [], []
    if has_weights:
        inputs.append(jnp.asarray(weights, jnp.float32).reshape(c))
        in_specs.append(pl.BlockSpec(memory_space=pltpu.MemorySpace.SMEM))
    inputs.append(pred_f)
    in_specs.append(pl.BlockSpec((None, None, td, hw),
                                 lambda ni, di, ci: (ni, ci, di, 0)))
    if scale:
        # Exact reciprocal once per voxel in the wrapper; kernel multiplies.
        inputs.append(1.0 / jnp.sum(pred_f, axis=1))
        in_specs.append(pl.BlockSpec((None, td, hw),
                                     lambda ni, di, ci: (ni, di, 0)))
    inputs.append(label_f)
    in_specs.append(pl.BlockSpec((None, None, td, hw),
                                 lambda ni, di, ci: (ni, ci, di, 0)))
    if bnd_per_channel:
        inputs.append(_depth_halo(label_f, td, r, 0.0))            # (n,c,ndt,2r,hw)
        in_specs.append(pl.BlockSpec((None, None, None, 2 * r, hw),
                                     lambda ni, di, ci: (ni, ci, di, 0, 0)))
    if bnd_once:
        if label_indices is not None:
            lidx = jnp.asarray(label_indices).reshape(n, d, hw).astype(jnp.float32)
        else:
            lidx = jnp.argmax(label_f, axis=1).astype(jnp.float32)  # (n,d,hw)
        inputs.append(lidx)
        in_specs.append(pl.BlockSpec((None, td, hw),
                                     lambda ni, di, ci: (ni, di, 0)))
        inputs.append(_depth_halo(lidx, td, r, -1.0))               # (n,ndt,2r,hw)
        in_specs.append(pl.BlockSpec((None, None, 2 * r, hw),
                                     lambda ni, di, ci: (ni, di, 0, 0)))
    if use_boundary:
        wcol = np.arange(hw, dtype=np.int64) % w
        hrow = np.arange(hw, dtype=np.int64) // w
        rows = ([wcol <= w - 1 - o for o in range(1, r + 1)]
                + [wcol >= o for o in range(1, r + 1)]
                + [hrow <= h - 1 - o for o in range(1, r + 1)]
                + [hrow >= o for o in range(1, r + 1)])
        masks = np.stack(rows).astype(np.float32)                   # (4r, hw)
        tpos = np.arange(td)
        bd_core = (np.abs(tpos[:, None] - tpos[None, :]) <= r).astype(np.float32)
        inputs += [jnp.asarray(masks), jnp.asarray(bd_core)]
        in_specs += [pl.BlockSpec((4 * r, hw), lambda ni, di, ci: (0, 0)),
                     pl.BlockSpec((td, td), lambda ni, di, ci: (0, 0))]

    scratch_shapes = []
    if has_acc2:
        scratch_shapes.append(pltpu.VMEM((td, hw), jnp.float32))
    if use_boundary:
        scratch_shapes.append(pltpu.VMEM((td, hw), jnp.float32))

    kernel = functools.partial(
        _ce_kernel, C=c, W=w, HW=hw, TD=td, r=r, pool=pool, bwf=bwf, eps=eps,
        scale=bool(scale), has_weights=has_weights, one_hot=one_hot,
        bnd_per_channel=bnd_per_channel, bnd_once=bnd_once, has_acc2=has_acc2)

    out = pl.pallas_call(
        kernel,
        out_shape=jax.ShapeDtypeStruct((n, d, hw), jnp.float32),
        grid=(n, ndt, c),
        in_specs=in_specs,
        out_specs=pl.BlockSpec((None, td, hw), lambda ni, di, ci: (ni, di, 0)),
        scratch_shapes=scratch_shapes,
        compiler_params=pltpu.CompilerParams(
            dimension_semantics=("parallel", "parallel", "arbitrary"),
            vmem_limit_bytes=_vmem_limit_bytes()),
    )(*inputs)
    return out.reshape(n, d, h, w)


# ------------------------------------------------------------------------- reference

def _reference(y_pred, y_true, weights, scale, bwf, pool, eps):
    """Pure-JAX reproduction of the PyTorch forward."""
    if scale:
        y_pred = y_pred / jnp.sum(y_pred, axis=1, keepdims=True)
    yp = jnp.clip(y_pred, eps, 1.0)
    ce = -y_true * jnp.log(yp)
    loss = ce
    if weights is not None:
        loss = ce * weights.reshape(1, -1, 1, 1, 1)
    if bwf is not None:
        pad = (pool - 1) // 2
        avg = lax.reduce_window(
            y_true, 0.0, lax.add, (1, 1, pool, pool, pool), (1, 1, 1, 1, 1),
            [(0, 0), (0, 0), (pad, pad), (pad, pad), (pad, pad)]) / float(pool ** 3)
        in_band = jnp.logical_and(avg >= eps, avg <= 1.0 - eps)
        boundary = jnp.max(in_band.astype(jnp.float32), axis=1, keepdims=True) * bwf
        loss = loss + ce * boundary
    return jnp.mean(loss, axis=1)


# ------------------------------------------------------------------------------ main

if __name__ == "__main__":
    N, C, D, H, W = 2, 4, 16, 16, 16
    POOL, BWF, EPS = 3, 10.0, 1e-7

    key = jax.random.PRNGKey(0)
    k1, k2 = jax.random.split(key)
    pred = jnp.exp(0.5 * jax.random.normal(k1, (N, C, D, H, W), jnp.float32))
    label_idx = jax.random.randint(k2, (N, D, H, W), 0, C)
    label = jax.nn.one_hot(label_idx, C, axis=1, dtype=jnp.float32)   # NCDHW one-hot

    def check(out, ref, name):
        assert out.shape == ref.shape, (name, out.shape, ref.shape)
        err = float(jnp.max(jnp.abs(out - ref)))
        assert jnp.allclose(out, ref, rtol=1e-4, atol=1e-4), f"{name} err={err}"

    ref_b = _reference(pred, label, None, True, BWF, POOL, EPS)

    # 1) general (soft-label-safe) path, 2 depth tiles -> halo machinery exercised.
    out = jax.block_until_ready(categorical_crossentropy_loss(
        pred, label, scale=True, boundaries_weight_factor=BWF,
        boundaries_pool=POOL, epsilon=EPS, d_tile=8))
    check(out, ref_b, "general+boundary")

    # 2) one-hot fast path: boundary computed once per depth tile from label indices.
    out = jax.block_until_ready(categorical_crossentropy_loss(
        pred, label, scale=True, boundaries_weight_factor=BWF,
        boundaries_pool=POOL, epsilon=EPS, one_hot_labels=True, d_tile=8,
        label_indices=label_idx))
    check(out, ref_b, "one-hot+boundary")

    # 3) one-hot fast path, argmax fallback and default depth tiling.
    out = jax.block_until_ready(categorical_crossentropy_loss(
        pred, label, scale=True, boundaries_weight_factor=BWF,
        boundaries_pool=POOL, epsilon=EPS, one_hot_labels=True))
    check(out, ref_b, "one-hot+boundary (default tile)")

    # 4) class weights, boundaries off (no scratch accumulators allocated).
    wts = jnp.asarray([0.4, 0.8, 1.2, 1.6], jnp.float32)
    out = jax.block_until_ready(categorical_crossentropy_loss(
        pred, label, weights=wts, scale=True, epsilon=EPS, d_tile=8))
    check(out, _reference(pred, label, wts, True, None, None, EPS), "weights")

    # 5) class weights + boundaries (both channel accumulators live).
    out = jax.block_until_ready(categorical_crossentropy_loss(
        pred, label, weights=wts, scale=True, boundaries_weight_factor=BWF,
        boundaries_pool=POOL, epsilon=EPS, d_tile=8))
    check(out, _reference(pred, label, wts, True, BWF, POOL, EPS), "weights+boundary")

    # 6) one-hot + class weights + boundaries.
    out = jax.block_until_ready(categorical_crossentropy_loss(
        pred, label, weights=wts, scale=True, boundaries_weight_factor=BWF,
        boundaries_pool=POOL, epsilon=EPS, one_hot_labels=True, d_tile=8))
    check(out, _reference(pred, label, wts, True, BWF, POOL, EPS),
          "one-hot+weights+boundary")

    # 7) scale=False (pre-normalized probabilities, clip path).
    pred_n = pred / jnp.sum(pred, axis=1, keepdims=True)
    out = jax.block_until_ready(categorical_crossentropy_loss(
        pred_n, label, scale=False, boundaries_weight_factor=BWF,
        boundaries_pool=POOL, epsilon=EPS, d_tile=8))
    check(out, _reference(pred_n, label, None, False, BWF, POOL, EPS), "scale=False")

    print("KERNEL_OK")
</pallas_src>

<mosaic_0001>
module attributes {stable_mosaic.version = 11 : i64} {
  func.func @_ce_kernel(%arg0: i32, %arg1: i32, %arg2: i32, %arg3: memref<1x1x8x256xf32, #tpu.memory_space<vmem>>, %arg4: memref<1x8x256xf32, #tpu.memory_space<vmem>>, %arg5: memref<1x1x8x256xf32, #tpu.memory_space<vmem>>, %arg6: memref<1x1x1x2x256xf32, #tpu.memory_space<vmem>>, %arg7: memref<4x256xf32, #tpu.memory_space<vmem>>, %arg8: memref<8x8xf32, #tpu.memory_space<vmem>>, %arg9: memref<1x8x256xf32, #tpu.memory_space<vmem>>, %arg10: memref<8x256xf32, #tpu.memory_space<vmem>>) attributes {dimension_semantics = [#tpu.dimension_semantics<parallel>, #tpu.dimension_semantics<parallel>, #tpu.dimension_semantics<arbitrary>], iteration_bounds = array<i64: 2, 2, 4>, scalar_prefetch = 0 : i64, scratch_operands = 1 : i64, tpu.core_type = #tpu.core_type<tc>, window_params = [{transform_indices = @transform_0, window_bounds = array<i64: 1, 1, 8, 256>}, {transform_indices = @transform_1, window_bounds = array<i64: 1, 8, 256>}, {transform_indices = @transform_2, window_bounds = array<i64: 1, 1, 8, 256>}, {transform_indices = @transform_3, window_bounds = array<i64: 1, 1, 1, 2, 256>}, {pipeline_mode = #tpu.pipeline_mode<synchronous>, transform_indices = @transform_4, window_bounds = array<i64: 4, 256>}, {pipeline_mode = #tpu.pipeline_mode<synchronous>, transform_indices = @transform_5, window_bounds = array<i64: 8, 8>}, {transform_indices = @transform_6, window_bounds = array<i64: 1, 8, 256>}]} {
    %c0_i32 = arith.constant 0 : i32
    %0 = arith.cmpi eq, %arg2, %c0_i32 : i32
    %1 = arith.extui %0 : i1 to i32
    %c0_i32_0 = arith.constant 0 : i32
    %2 = arith.cmpi ne, %1, %c0_i32_0 : i32
    scf.if %2 {
      %cst_55 = arith.constant 0.000000e+00 : f32
      %106 = vector.broadcast %cst_55 : f32 to vector<8x256xf32>
      %c0_56 = arith.constant 0 : index
      %c0_57 = arith.constant 0 : index
      %c0_58 = arith.constant 0 : index
      %107 = vector.load %arg9[%c0_56, %c0_57, %c0_58] : memref<1x8x256xf32, #tpu.memory_space<vmem>>, vector<1x8x256xf32>
      %108 = vector.shape_cast %107 : vector<1x8x256xf32> to vector<8x256xf32>
      %109 = vector.shape_cast %106 : vector<8x256xf32> to vector<1x8x256xf32>
      tpu.vector_store %arg9[%c0_56, %c0_57, %c0_58], %109 {strides = array<i32>} : memref<1x8x256xf32, #tpu.memory_space<vmem>>, vector<1x8x256xf32>,
      %cst_59 = arith.constant 0.000000e+00 : f32
      %110 = vector.broadcast %cst_59 : f32 to vector<8x256xf32>
      %c0_60 = arith.constant 0 : index
      %c0_61 = arith.constant 0 : index
      %111 = vector.load %arg10[%c0_60, %c0_61] : memref<8x256xf32, #tpu.memory_space<vmem>>, vector<8x256xf32>
      tpu.vector_store %arg10[%c0_60, %c0_61], %110 {strides = array<i32>} : memref<8x256xf32, #tpu.memory_space<vmem>>, vector<8x256xf32>,
    } else {
    }
    %c0 = arith.constant 0 : index
    %c0_1 = arith.constant 0 : index
    %c0_2 = arith.constant 0 : index
    %c0_3 = arith.constant 0 : index
    %3 = vector.load %arg5[%c0, %c0_1, %c0_2, %c0_3] : memref<1x1x8x256xf32, #tpu.memory_space<vmem>>, vector<1x1x8x256xf32>
    %4 = vector.shape_cast %3 : vector<1x1x8x256xf32> to vector<8x256xf32>
    %c0_4 = arith.constant 0 : index
    %c0_5 = arith.constant 0 : index
    %c0_6 = arith.constant 0 : index
    %c0_7 = arith.constant 0 : index
    %5 = vector.load %arg3[%c0_4, %c0_5, %c0_6, %c0_7] : memref<1x1x8x256xf32, #tpu.memory_space<vmem>>, vector<1x1x8x256xf32>
    %6 = vector.shape_cast %5 : vector<1x1x8x256xf32> to vector<8x256xf32>
    %c0_8 = arith.constant 0 : index
    %c0_9 = arith.constant 0 : index
    %c0_10 = arith.constant 0 : index
    %7 = vector.load %arg4[%c0_8, %c0_9, %c0_10] : memref<1x8x256xf32, #tpu.memory_space<vmem>>, vector<1x8x256xf32>
    %8 = vector.shape_cast %7 : vector<1x8x256xf32> to vector<8x256xf32>
    %9 = arith.mulf %6, %8 : vector<8x256xf32>
    %cst = arith.constant 0.000000e+00 : f32
    %10 = vector.broadcast %cst : f32 to vector<8x256xf32>
    %11 = arith.subf %10, %4 : vector<8x256xf32>
    %cst_11 = arith.constant 1.000000e-07 : f32
    %12 = vector.broadcast %cst_11 : f32 to vector<8x256xf32>
    %13 = arith.maximumf %9, %12 : vector<8x256xf32>
    %14 = math.log %13 : vector<8x256xf32>
    %15 = arith.mulf %11, %14 : vector<8x256xf32>
    %c0_12 = arith.constant 0 : index
    %c0_13 = arith.constant 0 : index
    %c0_14 = arith.constant 0 : index
    %16 = vector.load %arg9[%c0_12, %c0_13, %c0_14] : memref<1x8x256xf32, #tpu.memory_space<vmem>>, vector<1x8x256xf32>
    %17 = vector.shape_cast %16 : vector<1x8x256xf32> to vector<8x256xf32>
    %18 = arith.addf %17, %15 : vector<8x256xf32>
    %c0_15 = arith.constant 0 : index
    %c0_16 = arith.constant 0 : index
    %c0_17 = arith.constant 0 : index
    %19 = vector.load %arg9[%c0_15, %c0_16, %c0_17] : memref<1x8x256xf32, #tpu.memory_space<vmem>>, vector<1x8x256xf32>
    %20 = vector.shape_cast %19 : vector<1x8x256xf32> to vector<8x256xf32>
    %21 = vector.shape_cast %18 : vector<8x256xf32> to vector<1x8x256xf32>
    tpu.vector_store %arg9[%c0_15, %c0_16, %c0_17], %21 {strides = array<i32>} : memref<1x8x256xf32, #tpu.memory_space<vmem>>, vector<1x8x256xf32>,
    %c0_18 = arith.constant 0 : index
    %c0_19 = arith.constant 0 : index
    %22 = vector.load %arg7[%c0_18, %c0_19] : memref<4x256xf32, #tpu.memory_space<vmem>>, vector<1x256xf32>
    %c1 = arith.constant 1 : index
    %c0_20 = arith.constant 0 : index
    %23 = vector.load %arg7[%c1, %c0_20] : memref<4x256xf32, #tpu.memory_space<vmem>>, vector<1x256xf32>
    %c2 = arith.constant 2 : index
    %c0_21 = arith.constant 0 : index
    %24 = vector.load %arg7[%c2, %c0_21] : memref<4x256xf32, #tpu.memory_space<vmem>>, vector<1x256xf32>
    %c3 = arith.constant 3 : index
    %c0_22 = arith.constant 0 : index
    %25 = vector.load %arg7[%c3, %c0_22] : memref<4x256xf32, #tpu.memory_space<vmem>>, vector<1x256xf32>
    %c255_i32 = arith.constant 255 : i32
    %26 = tpu.dynamic_rotate %4 by %c255_i32 dim 1 : vector<8x256xf32>, i32 -> vector<8x256xf32>
    %27 = vector.broadcast %22 : vector<1x256xf32> to vector<8x256xf32>
    %28 = arith.mulf %26, %27 : vector<8x256xf32>
    %c1_i32 = arith.constant 1 : i32
    %29 = tpu.dynamic_rotate %4 by %c1_i32 dim 1 : vector<8x256xf32>, i32 -> vector<8x256xf32>
    %30 = vector.broadcast %23 : vector<1x256xf32> to vector<8x256xf32>
    %31 = arith.mulf %29, %30 : vector<8x256xf32>
    %32 = arith.addf %4, %28 : vector<8x256xf32>
    %33 = arith.addf %32, %31 : vector<8x256xf32>
    %c240_i32 = arith.constant 240 : i32
    %34 = tpu.dynamic_rotate %33 by %c240_i32 dim 1 : vector<8x256xf32>, i32 -> vector<8x256xf32>
    %35 = vector.broadcast %24 : vector<1x256xf32> to vector<8x256xf32>
    %36 = arith.mulf %34, %35 : vector<8x256xf32>
    %c16_i32 = arith.constant 16 : i32
    %37 = tpu.dynamic_rotate %33 by %c16_i32 dim 1 : vector<8x256xf32>, i32 -> vector<8x256xf32>
    %38 = vector.broadcast %25 : vector<1x256xf32> to vector<8x256xf32>
    %39 = arith.mulf %37, %38 : vector<8x256xf32>
    %40 = arith.addf %33, %36 : vector<8x256xf32>
    %41 = arith.addf %40, %39 : vector<8x256xf32>
    %c0_23 = arith.constant 0 : index
    %c0_24 = arith.constant 0 : index
    %42 = vector.load %arg8[%c0_23, %c0_24] : memref<8x8xf32, #tpu.memory_space<vmem>>, vector<8x8xf32>
    %cst_25 = arith.constant dense<0.000000e+00> : vector<8x256xf32>
    %43 = tpu.matmul %42, %41, %cst_25 {dimension_numbers = #tpu.dot_dimension_numbers<[1], [0], [0], [1], [0, 0, 1, 1], [], []>} : vector<8x8xf32>, vector<8x256xf32>, vector<8x256xf32> -> vector<8x256xf32>
    %44 = tpu.iota {dimensions = array<i32: 0>} : vector<8x1xi32>
    %c0_26 = arith.constant 0 : index
    %c0_27 = arith.constant 0 : index
    %c0_28 = arith.constant 0 : index
    %c0_29 = arith.constant 0 : index
    %c0_30 = arith.constant 0 : index
    %45 = vector.load %arg6[%c0_26, %c0_27, %c0_28, %c0_29, %c0_30] : memref<1x1x1x2x256xf32, #tpu.memory_space<vmem>>, vector<1x1x1x1x256xf32>
    %46 = vector.shape_cast %45 : vector<1x1x1x1x256xf32> to vector<1x256xf32>
    %c255_i32_31 = arith.constant 255 : i32
    %47 = tpu.dynamic_rotate %46 by %c255_i32_31 dim 1 : vector<1x256xf32>, i32 -> vector<1x256xf32>
    %48 = arith.mulf %47, %22 : vector<1x256xf32>
    %c1_i32_32 = arith.constant 1 : i32
    %49 = tpu.dynamic_rotate %46 by %c1_i32_32 dim 1 : vector<1x256xf32>, i32 -> vector<1x256xf32>
    %50 = arith.mulf %49, %23 : vector<1x256xf32>
    %51 = arith.addf %46, %48 : vector<1x256xf32>
    %52 = arith.addf %51, %50 : vector<1x256xf32>
    %c240_i32_33 = arith.constant 240 : i32
    %53 = tpu.dynamic_rotate %52 by %c240_i32_33 dim 1 : vector<1x256xf32>, i32 -> vector<1x256xf32>
    %54 = arith.mulf %53, %24 : vector<1x256xf32>
    %c16_i32_34 = arith.constant 16 : i32
    %55 = tpu.dynamic_rotate %52 by %c16_i32_34 dim 1 : vector<1x256xf32>, i32 -> vector<1x256xf32>
    %56 = arith.mulf %55, %25 : vector<1x256xf32>
    %57 = arith.addf %52, %54 : vector<1x256xf32>
    %58 = arith.addf %57, %56 : vector<1x256xf32>
    %c0_35 = arith.constant 0 : index
    %c0_36 = arith.constant 0 : index
    %c0_37 = arith.constant 0 : index
    %c1_38 = arith.constant 1 : index
    %c0_39 = arith.constant 0 : index
    %59 = vector.load %arg6[%c0_35, %c0_36, %c0_37, %c1_38, %c0_39] : memref<1x1x1x2x256xf32, #tpu.memory_space<vmem>>, vector<1x1x1x1x256xf32>
    %60 = vector.shape_cast %59 : vector<1x1x1x1x256xf32> to vector<1x256xf32>
    %c255_i32_40 = arith.constant 255 : i32
    %61 = tpu.dynamic_rotate %60 by %c255_i32_40 dim 1 : vector<1x256xf32>, i32 -> vector<1x256xf32>
    %62 = arith.mulf %61, %22 : vector<1x256xf32>
    %c1_i32_41 = arith.constant 1 : i32
    %63 = tpu.dynamic_rotate %60 by %c1_i32_41 dim 1 : vector<1x256xf32>, i32 -> vector<1x256xf32>
    %64 = arith.mulf %63, %23 : vector<1x256xf32>
    %65 = arith.addf %60, %62 : vector<1x256xf32>
    %66 = arith.addf %65, %64 : vector<1x256xf32>
    %c240_i32_42 = arith.constant 240 : i32
    %67 = tpu.dynamic_rotate %66 by %c240_i32_42 dim 1 : vector<1x256xf32>, i32 -> vector<1x256xf32>
    %68 = arith.mulf %67, %24 : vector<1x256xf32>
    %c16_i32_43 = arith.constant 16 : i32
    %69 = tpu.dynamic_rotate %66 by %c16_i32_43 dim 1 : vector<1x256xf32>, i32 -> vector<1x256xf32>
    %70 = arith.mulf %69, %25 : vector<1x256xf32>
    %71 = arith.addf %66, %68 : vector<1x256xf32>
    %72 = arith.addf %71, %70 : vector<1x256xf32>
    %c0_i32_44 = arith.constant 0 : i32
    %73 = vector.broadcast %c0_i32_44 : i32 to vector<8x1xi32>
    %74 = arith.cmpi sle, %44, %73 : vector<8x1xi32>
    %cst_45 = arith.constant 0.000000e+00 : f32
    %75 = vector.shape_cast %74 : vector<8x1xi1> to vector<8x1xi1>
    %76 = vector.broadcast %75 : vector<8x1xi1> to vector<8x256xi1>
    %77 = vector.shape_cast %58 : vector<1x256xf32> to vector<1x256xf32>
    %78 = vector.broadcast %77 : vector<1x256xf32> to vector<8x256xf32>
    %79 = vector.broadcast %cst_45 : f32 to vector<8x256xf32>
    %80 = arith.select %76, %78, %79 : vector<8x256xi1>, vector<8x256xf32>
    %81 = arith.addf %43, %80 : vector<8x256xf32>
    %c7_i32 = arith.constant 7 : i32
    %82 = vector.broadcast %c7_i32 : i32 to vector<8x1xi32>
    %83 = arith.cmpi sge, %44, %82 : vector<8x1xi32>
    %cst_46 = arith.constant 0.000000e+00 : f32
    %84 = vector.shape_cast %83 : vector<8x1xi1> to vector<8x1xi1>
    %85 = vector.broadcast %84 : vector<8x1xi1> to vector<8x256xi1>
    %86 = vector.shape_cast %72 : vector<1x256xf32> to vector<1x256xf32>
    %87 = vector.broadcast %86 : vector<1x256xf32> to vector<8x256xf32>
    %88 = vector.broadcast %cst_46 : f32 to vector<8x256xf32>
    %89 = arith.select %85, %87, %88 : vector<8x256xi1>, vector<8x256xf32>
    %90 = arith.addf %81, %89 : vector<8x256xf32>
    %cst_47 = arith.constant 0.0370370373 : f32
    %91 = vector.broadcast %cst_47 : f32 to vector<8x256xf32>
    %92 = arith.mulf %90, %91 : vector<8x256xf32>
    %cst_48 = arith.constant 1.000000e-07 : f32
    %93 = vector.broadcast %cst_48 : f32 to vector<8x256xf32>
    %94 = arith.cmpf oge, %92, %93 : vector<8x256xf32>
    %cst_49 = arith.constant 0.99999988 : f32
    %95 = vector.broadcast %cst_49 : f32 to vector<8x256xf32>
    %96 = arith.cmpf ole, %92, %95 : vector<8x256xf32>
    %97 = arith.andi %94, %96 : vector<8x256xi1>
    %c0_50 = arith.constant 0 : index
    %c0_51 = arith.constant 0 : index
    %98 = vector.load %arg10[%c0_50, %c0_51] : memref<8x256xf32, #tpu.memory_space<vmem>>, vector<8x256xf32>
    %99 = arith.extui %97 : vector<8x256xi1> to vector<8x256xi32>
    %100 = arith.sitofp %99 : vector<8x256xi32> to vector<8x256xf32>
    %101 = arith.maximumf %98, %100 : vector<8x256xf32>
    %c0_52 = arith.constant 0 : index
    %c0_53 = arith.constant 0 : index
    %102 = vector.load %arg10[%c0_52, %c0_53] : memref<8x256xf32, #tpu.memory_space<vmem>>, vector<8x256xf32>
    tpu.vector_store %arg10[%c0_52, %c0_53], %101 {strides = array<i32>} : memref<8x256xf32, #tpu.memory_space<vmem>>, vector<8x256xf32>,
    %c3_i32 = arith.constant 3 : i32
    %103 = arith.cmpi eq, %arg2, %c3_i32 : i32
    %104 = arith.extui %103 : i1 to i32
    %c0_i32_54 = arith.constant 0 : i32
    %105 = arith.cmpi ne, %104, %c0_i32_54 : i32
    scf.if %105 {
      %c0_55 = arith.constant 0 : index
      %c0_56 = arith.constant 0 : index
      %c0_57 = arith.constant 0 : index
      %106 = vector.load %arg9[%c0_55, %c0_56, %c0_57] : memref<1x8x256xf32, #tpu.memory_space<vmem>>, vector<1x8x256xf32>
      %107 = vector.shape_cast %106 : vector<1x8x256xf32> to vector<8x256xf32>
      %c0_58 = arith.constant 0 : index
      %c0_59 = arith.constant 0 : index
      %108 = vector.load %arg10[%c0_58, %c0_59] : memref<8x256xf32, #tpu.memory_space<vmem>>, vector<8x256xf32>
      %cst_60 = arith.constant 1.000000e+01 : f32
      %109 = vector.broadcast %cst_60 : f32 to vector<8x256xf32>
      %110 = arith.mulf %109, %108 : vector<8x256xf32>
      %111 = arith.mulf %110, %107 : vector<8x256xf32>
      %112 = arith.addf %107, %111 : vector<8x256xf32>
      %cst_61 = arith.constant 2.500000e-01 : f32
      %113 = vector.broadcast %cst_61 : f32 to vector<8x256xf32>
      %114 = arith.mulf %112, %113 : vector<8x256xf32>
      %c0_62 = arith.constant 0 : index
      %c0_63 = arith.constant 0 : index
      %c0_64 = arith.constant 0 : index
      %115 = vector.load %arg9[%c0_62, %c0_63, %c0_64] : memref<1x8x256xf32, #tpu.memory_space<vmem>>, vector<1x8x256xf32>
      %116 = vector.shape_cast %115 : vector<1x8x256xf32> to vector<8x256xf32>
      %117 = vector.shape_cast %114 : vector<8x256xf32> to vector<1x8x256xf32>
      tpu.vector_store %arg9[%c0_62, %c0_63, %c0_64], %117 {strides = array<i32>} : memref<1x8x256xf32, #tpu.memory_space<vmem>>, vector<1x8x256xf32>,
    } else {
    }
    return
  }
  func.func @transform_0(%arg0: i32, %arg1: i32, %arg2: i32) -> (i32, i32, i32, i32) {
    %c0_i32 = arith.constant 0 : i32
    %c0_i32_0 = arith.constant 0 : i32
    return %arg0, %arg2, %arg1, %c0_i32 : i32, i32, i32, i32
  }
  func.func @transform_1(%arg0: i32, %arg1: i32, %arg2: i32) -> (i32, i32, i32) {
    %c0_i32 = arith.constant 0 : i32
    %c0_i32_0 = arith.constant 0 : i32
    return %arg0, %arg1, %c0_i32 : i32, i32, i32
  }
  func.func @transform_2(%arg0: i32, %arg1: i32, %arg2: i32) -> (i32, i32, i32, i32) {
    %c0_i32 = arith.constant 0 : i32
    %c0_i32_0 = arith.constant 0 : i32
    return %arg0, %arg2, %arg1, %c0_i32 : i32, i32, i32, i32
  }
  func.func @transform_3(%arg0: i32, %arg1: i32, %arg2: i32) -> (i32, i32, i32, i32, i32) {
    %c0_i32 = arith.constant 0 : i32
    %c0_i32_0 = arith.constant 0 : i32
    %c0_i32_1 = arith.constant 0 : i32
    return %arg0, %arg2, %arg1, %c0_i32, %c0_i32_0 : i32, i32, i32, i32, i32
  }
  func.func @transform_4(%arg0: i32, %arg1: i32, %arg2: i32) -> (i32, i32) {
    %c0_i32 = arith.constant 0 : i32
    %c0_i32_0 = arith.constant 0 : i32
    %c0_i32_1 = arith.constant 0 : i32
    return %c0_i32, %c0_i32_0 : i32, i32
  }
  func.func @transform_5(%arg0: i32, %arg1: i32, %arg2: i32) -> (i32, i32) {
    %c0_i32 = arith.constant 0 : i32
    %c0_i32_0 = arith.constant 0 : i32
    %c0_i32_1 = arith.constant 0 : i32
    return %c0_i32, %c0_i32_0 : i32, i32
  }
  func.func @transform_6(%arg0: i32, %arg1: i32, %arg2: i32) -> (i32, i32, i32) {
    %c0_i32 = arith.constant 0 : i32
    %c0_i32_0 = arith.constant 0 : i32
    return %arg0, %arg1, %c0_i32 : i32, i32, i32
  }
}

</mosaic_0001>

<llo_original>
// kernel: tpu_custom_call.1
$region0: #{tpu_custom_call.1}
  #allocation0 [shape = 'u32[]', space=smem, size = 0x4, offset = 0x4, fixed_abs, tag = 'smem constant byte address 0x4 - core index']
  #allocation1 [shape = 'u32[144,128]{1,0:T(1,128)}', space=vmem, size = 0x12000, scoped, tag = 'internal scratch']
  #allocation2 [shape = 'f32[8,256]{1,0:T(8,128)}', space=vmem, size = 0x2000, scoped, tag = 'scratch operand']
  %s0 = inlined_call_operand.hbm [shape: f32[2,4,16,256], index: 0, kind: input, shape index: {}]
  %s1 = inlined_call_operand.hbm [shape: f32[2,16,256], index: 1, kind: input, shape index: {}]
  %s2 = inlined_call_operand.hbm [shape: f32[2,4,16,256], index: 2, kind: input, shape index: {}]
  %s3 = inlined_call_operand.hbm [shape: f32[2,4,2,2,256], index: 3, kind: input, shape index: {}]
  %s4 = inlined_call_operand.vmem [shape: f32[4,256], index: 4, kind: input, shape index: {}]
  %s5 = inlined_call_operand.vmem [shape: f32[8,8], index: 5, kind: input, shape index: {}]
  %s6 = inlined_call_operand.hbm [shape: f32[2,16,256], index: 6, kind: output, shape index: {}]
  %s7 = sld [smem:[#allocation0]]
  $region81: #{tpu_custom_call.1} parent=0
    _
  %s9 = ssub.s32 1, %s7
  %s10 = scalar_select 0, %s9, %s7
  $region1: #{tpu_custom_call.1} parent=0
    #allocation3 [shape = 'u8[16384]{0}', space=vmem, size = 0x4000, scoped, tag = 'input window, operand 0']
    #allocation4 [shape = 's32[2]{0}', space=sflag, size = 0x8, scoped, tag = 'scoped memory for tpu_custom_call.1']
    #allocation5 [shape = 's32[2]{0}', space=sflag, size = 0x8, scoped, tag = 'scoped memory for tpu_custom_call.1']
    #allocation6 [shape = 'u8[16384]{0}', space=vmem, size = 0x4000, scoped, tag = 'input window, operand 1']
    #allocation7 [shape = 's32[2]{0}', space=sflag, size = 0x8, scoped, tag = 'scoped memory for tpu_custom_call.1']
    #allocation8 [shape = 'u8[16384]{0}', space=vmem, size = 0x4000, scoped, tag = 'input window, operand 2']
    #allocation9 [shape = 'u8[4096]{0}', space=vmem, size = 0x1000, scoped, tag = 'input window, operand 3']
    #allocation10 [shape = 's32[2]{0}', space=sflag, size = 0x8, scoped, tag = 'scoped memory for tpu_custom_call.1']
    #allocation11 [shape = 'u8[16384]{0}', space=vmem, size = 0x4000, scoped, tag = 'output window, operand 0']
    %11 = vsyncpa [#allocation4], 0
    %s12 = scalar_lea.sflag [#allocation4], 1
    %13 = vsyncpa %s12, 0
    %14 = vsyncpa [#allocation7], 0
    %s15 = scalar_lea.sflag [#allocation7], 1
    %16 = vsyncpa %s15, 0
    %17 = vsyncpa [#allocation10], 0
    %s18 = scalar_lea.sflag [#allocation10], 1
    %19 = vsyncpa %s18, 0
    %20 = vsyncpa [#allocation5], 0
    %s21 = scalar_lea.sflag [#allocation5], 1
    %22 = vsyncpa %s21, 0
    loop: start=0, step=1, limit=18
    $region2: #{tpu_custom_call.1} parent=1 // loop_pre_header
      _
    $region3: #{tpu_custom_call.1} parent=1 // loop_header
      %s24 = sphi 0, %s28
      %p25 = scmp.ge.s32.totalorder %s24, 18
      %s31 = sphi 0, %s50
      %s32 = sphi 0, %s46
      %s33 = sphi 0, %s42
      %s34 = sphi 0, %s31
      %s35 = sphi 0, %s32
      %s36 = sphi 0, %s33
      %s37 = sphi 0, %s34
      %s38 = sphi 0, %s35
      %s39 = sphi 0, %s36
      %s57 = sphi 0, %s59
      %s60 = sphi 0, %s57
      %s61 = sphi 0, %s60
      %s77 = sphi 0, %s61
      %s85 = sphi 0, %s87
      %s88 = sphi 0, %s85
      %s89 = sphi 0, %s88
      %s105 = sphi 0, %s89
      %s115 = sphi 0, %s117
      %s118 = sphi 0, %s115
      %s119 = sphi 0, %s118
      %s135 = sphi 0, %s119
      %s145 = sphi 0, %s147
      %s148 = sphi 0, %s145
      %s149 = sphi 0, %s148
      %s165 = sphi 0, %s149
      %s169 = sphi 0, %s169
      %s171 = sphi 0, %s169
      %s172 = sphi 0, %s171
      %s186 = sphi 0, %s172
      %s190 = sphi 0, %s190
      %s192 = sphi 0, %s190
      %s193 = sphi 0, %s192
      %s207 = sphi 0, %s193
      %s215 = sphi 0, %s217
      %s218 = sphi 0, %s215
      %s219 = sphi 0, %s218
      %s235 = sphi 0, %s219
    $region4: #{tpu_custom_call.1} parent=1 // loop_header_branch
      %27 = sbr.rel (%p25) target = $region8
    $region5: #{tpu_custom_call.1} parent=1 // loop_body
      %s29 = ssub.s32 %s24, 1
      %s30 = ssub.s32 %s24, 2
      %s40 = sadd.s32 1, %s33
      %p41 = scmp.ge.s32.totalorder %s40, 4
      %s42 = scalar_select %p41, 0, %s40
      %s43 = sadd.s32 1, %s32
      %s44 = scalar_select %p41, %s43, %s32
      %p45 = scmp.ge.s32.totalorder %s44, 2
      %s46 = scalar_select %p45, 0, %s44
      %s47 = sadd.s32 1, %s31
      %s48 = scalar_select %p45, %s47, %s31
      %p49 = scmp.ge.s32.totalorder %s48, 2
      %s50 = scalar_select %p49, 0, %s48
      %s51 = ssub.s32 %s31, %s50
      %s52 = ssub.s32 %s33, %s42
      %s53 = sor.u32 %s51, %s52
      %s54 = ssub.s32 %s32, %s46
      %s55 = sor.u32 %s53, %s54
      %p56 = scmp.eq.s32.totalorder %s55, 0
      %s58 = sadd.s32 %s57, 1
      %s59 = scalar_select %p56, %s57, %s58
      %p62 = pneg %p56
      %p63 = scmp.eq.s32.totalorder %s24, 15
      %p64 = por %p62, %p63
      %p65 = scmp.ne.s32.totalorder %s57, %s60
      %p66 = scmp.eq.s32.totalorder %s24, 0
      %p67 = por %p65, %p66
      %p68 = scmp.ne.s32.totalorder %s57, %s60
      %p69 = scmp.eq.s32.totalorder %s29, 15
      %p70 = por %p68, %p69
      %p71 = scmp.ne.s32.totalorder %s60, %s61
      %p72 = scmp.eq.s32.totalorder %s29, 0
      %p73 = por %p71, %p72
      %p74 = scmp.ne.s32.totalorder %s60, %s61
      %p75 = scmp.eq.s32.totalorder %s30, 15
      %p76 = por %p74, %p75
      %p78 = scmp.ne.s32.totalorder %s61, %s77
      %p79 = scmp.eq.s32.totalorder %s30, 0
      %p80 = por %p78, %p79
      %s81 = ssub.s32 %s31, %s50
      %s82 = ssub.s32 %s32, %s46
      %s83 = sor.u32 %s81, %s82
      %p84 = scmp.eq.s32.totalorder %s83, 0
      %s86 = sadd.s32 %s85, 1
      %s87 = scalar_select %p84, %s85, %s86
      %p90 = pneg %p84
      %p91 = scmp.eq.s32.totalorder %s24, 15
      %p92 = por %p90, %p91
      %p93 = scmp.ne.s32.totalorder %s85, %s88
      %p94 = scmp.eq.s32.totalorder %s24, 0
      %p95 = por %p93, %p94
      %p96 = scmp.ne.s32.totalorder %s85, %s88
      %p97 = scmp.eq.s32.totalorder %s29, 15
      %p98 = por %p96, %p97
      %p99 = scmp.ne.s32.totalorder %s88, %s89
      %p100 = scmp.eq.s32.totalorder %s29, 0
      %p101 = por %p99, %p100
      %p102 = scmp.ne.s32.totalorder %s88, %s89
      %p103 = scmp.eq.s32.totalorder %s30, 15
      %p104 = por %p102, %p103
      %p106 = scmp.ne.s32.totalorder %s89, %s105
      %p107 = scmp.eq.s32.totalorder %s30, 0
      %p108 = por %p106, %p107
      %s109 = ssub.s32 %s31, %s50
      %s110 = ssub.s32 %s33, %s42
      %s111 = sor.u32 %s109, %s110
      %s112 = ssub.s32 %s32, %s46
      %s113 = sor.u32 %s111, %s112
      %p114 = scmp.eq.s32.totalorder %s113, 0
      %s116 = sadd.s32 %s115, 1
      %s117 = scalar_select %p114, %s115, %s116
      %p120 = pneg %p114
      %p121 = scmp.eq.s32.totalorder %s24, 15
      %p122 = por %p120, %p121
      %p123 = scmp.ne.s32.totalorder %s115, %s118
      %p124 = scmp.eq.s32.totalorder %s24, 0
      %p125 = por %p123, %p124
      %p126 = scmp.ne.s32.totalorder %s115, %s118
      %p127 = scmp.eq.s32.totalorder %s29, 15
      %p128 = por %p126, %p127
      %p129 = scmp.ne.s32.totalorder %s118, %s119
      %p130 = scmp.eq.s32.totalorder %s29, 0
      %p131 = por %p129, %p130
      %p132 = scmp.ne.s32.totalorder %s118, %s119
      %p133 = scmp.eq.s32.totalorder %s30, 15
      %p134 = por %p132, %p133
      %p136 = scmp.ne.s32.totalorder %s119, %s135
      %p137 = scmp.eq.s32.totalorder %s30, 0
      %p138 = por %p136, %p137
      %s139 = ssub.s32 %s31, %s50
      %s140 = ssub.s32 %s33, %s42
      %s141 = sor.u32 %s139, %s140
      %s142 = ssub.s32 %s32, %s46
      %s143 = sor.u32 %s141, %s142
      %p144 = scmp.eq.s32.totalorder %s143, 0
      %s146 = sadd.s32 %s145, 1
      %s147 = scalar_select %p144, %s145, %s146
      %p150 = pneg %p144
      %p151 = scmp.eq.s32.totalorder %s24, 15
      %p152 = por %p150, %p151
      %p153 = scmp.ne.s32.totalorder %s145, %s148
      %p154 = scmp.eq.s32.totalorder %s24, 0
      %p155 = por %p153, %p154
      %p156 = scmp.ne.s32.totalorder %s145, %s148
      %p157 = scmp.eq.s32.totalorder %s29, 15
      %p158 = por %p156, %p157
      %p159 = scmp.ne.s32.totalorder %s148, %s149
      %p160 = scmp.eq.s32.totalorder %s29, 0
      %p161 = por %p159, %p160
      %p162 = scmp.ne.s32.totalorder %s148, %s149
      %p163 = scmp.eq.s32.totalorder %s30, 15
      %p164 = por %p162, %p163
      %p166 = scmp.ne.s32.totalorder %s149, %s165
      %p167 = scmp.eq.s32.totalorder %s30, 0
      %p168 = por %p166, %p167
      %s170 = sadd.s32 %s169, 1
      %p173 = scmp.eq.s32.totalorder %s24, 15
      %p174 = scmp.ne.s32.totalorder %s169, %s171
      %p175 = scmp.eq.s32.totalorder %s24, 0
      %p176 = por %p174, %p175
      %p177 = scmp.ne.s32.totalorder %s169, %s171
      %p178 = scmp.eq.s32.totalorder %s29, 15
      %p179 = por %p177, %p178
      %p180 = scmp.ne.s32.totalorder %s171, %s172
      %p181 = scmp.eq.s32.totalorder %s29, 0
      %p182 = por %p180, %p181
      %p183 = scmp.ne.s32.totalorder %s171, %s172
      %p184 = scmp.eq.s32.totalorder %s30, 15
      %p185 = por %p183, %p184
      %p187 = scmp.ne.s32.totalorder %s172, %s186
      %p188 = scmp.eq.s32.totalorder %s30, 0
      %p189 = por %p187, %p188
      %s191 = sadd.s32 %s190, 1
      %p194 = scmp.eq.s32.totalorder %s24, 15
      %p195 = scmp.ne.s32.totalorder %s190, %s192
      %p196 = scmp.eq.s32.totalorder %s24, 0
      %p197 = por %p195, %p196
      %p198 = scmp.ne.s32.totalorder %s190, %s192
      %p199 = scmp.eq.s32.totalorder %s29, 15
      %p200 = por %p198, %p199
      %p201 = scmp.ne.s32.totalorder %s192, %s193
      %p202 = scmp.eq.s32.totalorder %s29, 0
      %p203 = por %p201, %p202
      %p204 = scmp.ne.s32.totalorder %s192, %s193
      %p205 = scmp.eq.s32.totalorder %s30, 15
      %p206 = por %p204, %p205
      %p208 = scmp.ne.s32.totalorder %s193, %s207
      %p209 = scmp.eq.s32.totalorder %s30, 0
      %p210 = por %p208, %p209
      %s211 = ssub.s32 %s31, %s50
      %s212 = ssub.s32 %s32, %s46
      %s213 = sor.u32 %s211, %s212
      %p214 = scmp.eq.s32.totalorder %s213, 0
      %s216 = sadd.s32 %s215, 1
      %s217 = scalar_select %p214, %s215, %s216
      %p220 = pneg %p214
      %p221 = scmp.eq.s32.totalorder %s24, 15
      %p222 = por %p220, %p221
      %p223 = scmp.ne.s32.totalorder %s215, %s218
      %p224 = scmp.eq.s32.totalorder %s24, 0
      %p225 = por %p223, %p224
      %p226 = scmp.ne.s32.totalorder %s215, %s218
      %p227 = scmp.eq.s32.totalorder %s29, 15
      %p228 = por %p226, %p227
      %p229 = scmp.ne.s32.totalorder %s218, %s219
      %p230 = scmp.eq.s32.totalorder %s29, 0
      %p231 = por %p229, %p230
      %p232 = scmp.ne.s32.totalorder %s218, %s219
      %p233 = scmp.eq.s32.totalorder %s30, 15
      %p234 = por %p232, %p233
      %p236 = scmp.ne.s32.totalorder %s219, %s235
      %p237 = scmp.eq.s32.totalorder %s30, 0
      %p238 = por %p236, %p237
      %p239 = scmp.le.s32.totalorder 1, %s24
      %p240 = scmp.lt.s32.totalorder %s24, 17
      %p241 = pnand %p239, %p240
      %p242 = pneg %p241
      // Predicated region
      $region9: #{tpu_custom_call.1} parent=5 // pred_check
        _
      $region10: #{tpu_custom_call.1} parent=5 // pred_check_branch
        %244 = sbr.rel (%p241) target = $region12
      $region11: #{tpu_custom_call.1} parent=5 // pred_region
        %s245 = ssub.s32 %s24, 1
        // Predicated region
        $region13: #{tpu_custom_call.1} parent=11 // pred_check
          %p246 = pneg %p182
        $region14: #{tpu_custom_call.1} parent=11 // pred_check_branch
          %248 = sbr.rel (%p246) target = $region16
        $region15: #{tpu_custom_call.1} parent=11 // pred_region
          _
        $region16: #{tpu_custom_call.1} parent=11 // pred_fallthru
          _
        // Predicated region
        $region17: #{tpu_custom_call.1} parent=11 // pred_check
          %p249 = pneg %p203
        $region18: #{tpu_custom_call.1} parent=11 // pred_check_branch
          %251 = sbr.rel (%p249) target = $region20
        $region19: #{tpu_custom_call.1} parent=11 // pred_region
          _
        $region20: #{tpu_custom_call.1} parent=11 // pred_fallthru
          _
      $region12: #{tpu_custom_call.1} parent=5 // pred_fallthru
        _
      %p252 = scmp.lt.s32.totalorder %s24, 16
      // Predicated region
      $region21: #{tpu_custom_call.1} parent=5 // pred_check
        %p253 = pneg %p252
      $region22: #{tpu_custom_call.1} parent=5 // pred_check_branch
        %255 = sbr.rel (%p253) target = $region24
      $region23: #{tpu_custom_call.1} parent=5 // pred_region
        // Predicated region
        $region25: #{tpu_custom_call.1} parent=23 // pred_check
          %p256 = pneg %p67
        $region26: #{tpu_custom_call.1} parent=23 // pred_check_branch
          %258 = sbr.rel (%p256) target = $region28
        $region27: #{tpu_custom_call.1} parent=23 // pred_region
          %s259 = sand.u32 %s57, 1
          %s260 = scalar_lea.sflag [#allocation4], %s259
          %s261 = sand.u32 %s57, 1
          %s262 = smul.addr %s261, 16
          %s263 = scalar_lea.vmem [#allocation3], %s262
          %s265 = ssub.s32 256, 256
          %266 = vsyncadd %s260, %s265
          %s267 = smul.addr %s32, 2
          %s268 = smul.addr %s33, 4
          %s269 = sadd.s32 %s267, %s268
          %s270 = smul.addr %s31, 16
          %s271 = sadd.s32 %s269, %s270
          %s272 = smul.addr %s271, 128
          %s273 = scalar_lea.hbm %s0, %s272
          %s275 = sshll.u32 %s263, 4
          %s276 = int_to_ptr.vmem [resolvable:$true] %s275
          %278 = dma.hbm_to_vmem [thread:$0]  %s273, 256, %s276, %s260
        $region28: #{tpu_custom_call.1} parent=23 // pred_fallthru
          _
        // Predicated region
        $region29: #{tpu_custom_call.1} parent=23 // pred_check
          %p279 = pneg %p95
        $region30: #{tpu_custom_call.1} parent=23 // pred_check_branch
          %281 = sbr.rel (%p279) target = $region32
        $region31: #{tpu_custom_call.1} parent=23 // pred_region
          %s282 = sand.u32 %s24, 1
          %s283 = scalar_lea.sflag [#allocation7], %s282
          %s284 = sand.u32 %s85, 1
          %s285 = smul.addr %s284, 16
          %s286 = scalar_lea.vmem [#allocation6], %s285
          %s288 = ssub.s32 256, 256
          %289 = vsyncadd %s283, %s288
          %s290 = smul.addr %s32, 2
          %s291 = smul.addr %s31, 4
          %s292 = sadd.s32 %s290, %s291
          %s293 = smul.addr %s292, 128
          %s294 = scalar_lea.hbm %s1, %s293
          %s296 = sshll.u32 %s286, 4
          %s297 = int_to_ptr.vmem [resolvable:$true] %s296
          %299 = dma.hbm_to_vmem [thread:$0]  %s294, 256, %s297, %s283
        $region32: #{tpu_custom_call.1} parent=23 // pred_fallthru
          _
        // Predicated region
        $region33: #{tpu_custom_call.1} parent=23 // pred_check
          %p300 = pneg %p125
        $region34: #{tpu_custom_call.1} parent=23 // pred_check_branch
          %302 = sbr.rel (%p300) target = $region36
        $region35: #{tpu_custom_call.1} parent=23 // pred_region
          %s303 = sand.u32 %s24, 1
          %s304 = scalar_lea.sflag [#allocation7], %s303
          %s305 = sand.u32 %s115, 1
          %s306 = smul.addr %s305, 16
          %s307 = scalar_lea.vmem [#allocation8], %s306
          %s309 = ssub.s32 256, 256
          %310 = vsyncadd %s304, %s309
          %s311 = smul.addr %s32, 2
          %s312 = smul.addr %s33, 4
          %s313 = sadd.s32 %s311, %s312
          %s314 = smul.addr %s31, 16
          %s315 = sadd.s32 %s313, %s314
          %s316 = smul.addr %s315, 128
          %s317 = scalar_lea.hbm %s2, %s316
          %s319 = sshll.u32 %s307, 4
          %s320 = int_to_ptr.vmem [resolvable:$true] %s319
          %322 = dma.hbm_to_vmem [thread:$0]  %s317, 256, %s320, %s304
        $region36: #{tpu_custom_call.1} parent=23 // pred_fallthru
          _
        // Predicated region
        $region37: #{tpu_custom_call.1} parent=23 // pred_check
          %p323 = pneg %p155
        $region38: #{tpu_custom_call.1} parent=23 // pred_check_branch
          %325 = sbr.rel (%p323) target = $region40
        $region39: #{tpu_custom_call.1} parent=23 // pred_region
          %s326 = sand.u32 %s145, 1
          %s327 = scalar_lea.sflag [#allocation10], %s326
          %s328 = sand.u32 %s145, 1
          %s329 = smul.addr %s328, 4
          %s330 = scalar_lea.vmem [#allocation9], %s329
          %s332 = ssub.s32 64, 64
          %333 = vsyncadd %s327, %s332
          %s334 = smul.addr %s32, 2
          %s335 = smul.addr %s33, 4
          %s336 = sadd.s32 %s334, %s335
          %s337 = smul.addr %s31, 16
          %s338 = sadd.s32 %s336, %s337
          %s339 = smul.addr %s338, 32
          %s340 = scalar_lea.hbm %s3, %s339
          %s342 = sshll.u32 %s330, 4
          %s343 = int_to_ptr.vmem [resolvable:$true] %s342
          %345 = dma.hbm_to_vmem [thread:$0]  %s340, 64, %s343, %s327
        $region40: #{tpu_custom_call.1} parent=23 // pred_fallthru
          _
      $region24: #{tpu_custom_call.1} parent=5 // pred_fallthru
        _
      %p346 = scmp.le.s32.totalorder 1, %s24
      %p347 = scmp.lt.s32.totalorder %s24, 17
      %p348 = pnand %p346, %p347
      %p349 = pneg %p348
      // Predicated region
      $region41: #{tpu_custom_call.1} parent=5 // pred_check
        _
      $region42: #{tpu_custom_call.1} parent=5 // pred_check_branch
        %351 = sbr.rel (%p348) target = $region44
      $region43: #{tpu_custom_call.1} parent=5 // pred_region
        %s352 = ssub.s32 %s24, 1
        %s353 = sand.u32 %s60, 1
        %s354 = scalar_lea.sflag [#allocation4], %s353
        %s355 = sand.u32 %s60, 1
        %s356 = smul.addr %s355, 16
        %s357 = scalar_lea.vmem [#allocation3], %s356
        // Predicated region
        $region45: #{tpu_custom_call.1} parent=43 // pred_check
          %p358 = pneg %p73
        $region46: #{tpu_custom_call.1} parent=43 // pred_check_branch
          %360 = sbr.rel (%p358) target = $region48
        $region47: #{tpu_custom_call.1} parent=43 // pred_region
          %361 = dma.done %s354, 256
        $region48: #{tpu_custom_call.1} parent=43 // pred_fallthru
          _
        %s362 = sand.u32 %s29, 1
        %s363 = scalar_lea.sflag [#allocation7], %s362
        %s364 = sand.u32 %s88, 1
        %s365 = smul.addr %s364, 16
        %s366 = scalar_lea.vmem [#allocation6], %s365
        // Predicated region
        $region49: #{tpu_custom_call.1} parent=43 // pred_check
          %p367 = pneg %p101
        $region50: #{tpu_custom_call.1} parent=43 // pred_check_branch
          %369 = sbr.rel (%p367) target = $region52
        $region51: #{tpu_custom_call.1} parent=43 // pred_region
          %370 = dma.done %s363, 256
        $region52: #{tpu_custom_call.1} parent=43 // pred_fallthru
          _
        %s371 = sand.u32 %s29, 1
        %s372 = scalar_lea.sflag [#allocation7], %s371
        %s373 = sand.u32 %s118, 1
        %s374 = smul.addr %s373, 16
        %s375 = scalar_lea.vmem [#allocation8], %s374
        // Predicated region
        $region53: #{tpu_custom_call.1} parent=43 // pred_check
          %p376 = pneg %p131
        $region54: #{tpu_custom_call.1} parent=43 // pred_check_branch
          %378 = sbr.rel (%p376) target = $region56
        $region55: #{tpu_custom_call.1} parent=43 // pred_region
          %379 = dma.done %s372, 256
        $region56: #{tpu_custom_call.1} parent=43 // pred_fallthru
          _
        %s380 = sand.u32 %s148, 1
        %s381 = scalar_lea.sflag [#allocation10], %s380
        %s382 = sand.u32 %s148, 1
        %s383 = smul.addr %s382, 4
        %s384 = scalar_lea.vmem [#allocation9], %s383
        // Predicated region
        $region57: #{tpu_custom_call.1} parent=43 // pred_check
          %p385 = pneg %p161
        $region58: #{tpu_custom_call.1} parent=43 // pred_check_branch
          %387 = sbr.rel (%p385) target = $region60
        $region59: #{tpu_custom_call.1} parent=43 // pred_region
          %388 = dma.done %s381, 64
        $region60: #{tpu_custom_call.1} parent=43 // pred_fallthru
          _
        %s389 = sand.u32 %s60, 1
        %s390 = scalar_lea.sflag [#allocation4], %s389
        %s391 = sand.u32 %s60, 1
        %s392 = smul.addr %s391, 16
        %s393 = scalar_lea.vmem [#allocation3], %s392
        %p394 = pneg %p73
        %p395 = pneg %p70
        %s396 = sand.u32 %s29, 1
        %s397 = scalar_lea.sflag [#allocation7], %s396
        %s398 = sand.u32 %s88, 1
        %s399 = smul.addr %s398, 16
        %s400 = scalar_lea.vmem [#allocation6], %s399
        %p401 = pneg %p101
        %p402 = pneg %p98
        %s403 = sand.u32 %s29, 1
        %s404 = scalar_lea.sflag [#allocation7], %s403
        %s405 = sand.u32 %s118, 1
        %s406 = smul.addr %s405, 16
        %s407 = scalar_lea.vmem [#allocation8], %s406
        %p408 = pneg %p131
        %p409 = pneg %p128
        %s410 = sand.u32 %s148, 1
        %s411 = scalar_lea.sflag [#allocation10], %s410
        %s412 = sand.u32 %s148, 1
        %s413 = smul.addr %s412, 4
        %s414 = scalar_lea.vmem [#allocation9], %s413
        %p415 = pneg %p161
        %p416 = pneg %p158
        %p417 = pneg %p182
        %p418 = pneg %p179
        %p419 = pneg %p203
        %p420 = pneg %p200
        %p421 = pneg %p231
        %p422 = pneg %p228
        %s423 = sand.u32 %s218, 1
        %s424 = scalar_lea.sflag [#allocation5], %s423
        %s425 = sand.u32 %s218, 1
        %s426 = smul.addr %s425, 16
        %s427 = scalar_lea.vmem [#allocation11], %s426
        %p428 = scmp.eq.s32.totalorder %s36, 0
        // Predicated region
        $region61: #{tpu_custom_call.1} parent=43 // pred_check
          %p429 = pneg %p428
        $region62: #{tpu_custom_call.1} parent=43 // pred_check_branch
          %431 = sbr.rel (%p429) target = $region64
        $region63: #{tpu_custom_call.1} parent=43 // pred_region
          %432 = vst [vmem:[%s427] sm:$0xff] 0.0
          %433 = vst [vmem:[%s427 + $0x8] sm:$0xff] 0.0
          %434 = vst [vmem:[#allocation2] sm:$0xff] 0.0
          %435 = vst [vmem:[#allocation2 + $0x8] sm:$0xff] 0.0
        $region64: #{tpu_custom_call.1} parent=43 // pred_fallthru
          _
        %v436 = vld [vmem:[%s375] sm:$0xff]
        %v437 = vld [vmem:[%s375 + $0x8] sm:$0xff]
        %v438 = vld [vmem:[%s357] sm:$0xff]
        %v439 = vld [vmem:[%s357 + $0x8] sm:$0xff]
        %v440 = vld [vmem:[%s366] sm:$0xff]
        %v441 = vld [vmem:[%s366 + $0x8] sm:$0xff]
        %v442 = vmul.f32 %v438, %v440
        %v443 = vmul.f32 %v439, %v441
        %v444 = vsub.f32 0.0, %v436
        %v445 = vsub.f32 0.0, %v437
        %v446 = vmax.f32 %v442, 1e-07
        %v447 = vmax.f32 %v443, 1e-07
        %v448 = vlog2.pop %v446
        %v449 = vmul.f32 %v448, 0.6931472
        %v450 = vlog2.pop %v447
        %v451 = vmul.f32 %v450, 0.6931472
        %v452 = vmul.f32 %v444, %v449
        %v453 = vmul.f32 %v445, %v451
        %v454 = vld [vmem:[%s427] sm:$0xff]
        %v455 = vld [vmem:[%s427 + $0x8] sm:$0xff]
        %v456 = vadd.f32 %v454, %v452
        %v457 = vadd.f32 %v455, %v453
        %458 = vst [vmem:[%s427] sm:$0xff] %v456
        %459 = vst [vmem:[%s427 + $0x8] sm:$0xff] %v457
        %v460 = vld [vmem:[%s4] ss:$4 sm:$0x3]
        %s461 = scalar_lea.vmem %s4, 1
        %v462 = vld [vmem:[%s461] ss:$4 sm:$0x3]
        %s463 = scalar_lea.vmem %s4, 2
        %v464 = vld [vmem:[%s463] ss:$4 sm:$0x3]
        %s465 = scalar_lea.vmem %s4, 3
        %v466 = vld [vmem:[%s465] ss:$4 sm:$0x3]
        %467 = vrot.lane.b32.xlu0 %v436, 127
        %v468 = vpop.permute.xlu0 %467
        %469 = vrot.lane.b32.xlu0 %v437, 127
        %v470 = vpop.permute.xlu0 %469
        %v471 = vlaneseq
        %v472 = vand.u32 %v471, 127
        %vm473 = vcmp.lt.s32.totalorder %v472, 127
        %v474 = vsel %vm473, %v468, %v470
        %v475 = vsel %vm473, %v470, %v468
        %v477 = vlaneseq
        %v478 = vshrl.u32 %v477, 7
        %v479 = vsub.s32 0, %v478
        %v480 = vrot.slane %v460, %v479
        %v481 = vlaneseq
        %v482 = vshrl.u32 %v481, 7
        %v483 = vsub.s32 1, %v482
        %v484 = vrot.slane %v460, %v483
        %v487 = vmul.f32 %v474, %v480
        %v488 = vmul.f32 %v475, %v484
        %489 = vrot.lane.b32.xlu0 %v436, 1
        %v490 = vpop.permute.xlu0 %489
        %491 = vrot.lane.b32.xlu0 %v437, 1
        %v492 = vpop.permute.xlu0 %491
        %vm493 = vcmp.lt.s32.totalorder %v472, 1
        %v494 = vsel %vm493, %v490, %v492
        %v495 = vsel %vm493, %v492, %v490
        %v497 = vlaneseq
        %v498 = vshrl.u32 %v497, 7
        %v499 = vsub.s32 0, %v498
        %v500 = vrot.slane %v462, %v499
        %v501 = vlaneseq
        %v502 = vshrl.u32 %v501, 7
        %v503 = vsub.s32 1, %v502
        %v504 = vrot.slane %v462, %v503
        %v507 = vmul.f32 %v495, %v500
        %v508 = vmul.f32 %v494, %v504
        %v509 = vadd.f32 %v436, %v487
        %v510 = vadd.f32 %v437, %v488
        %v511 = vadd.f32 %v509, %v507
        %v512 = vadd.f32 %v510, %v508
        %513 = vrot.lane.b32.xlu0 %v511, 112
        %v514 = vpop.permute.xlu0 %513
        %515 = vrot.lane.b32.xlu0 %v512, 112
        %v516 = vpop.permute.xlu0 %515
        %vm517 = vcmp.lt.s32.totalorder %v472, 112
        %v518 = vsel %vm517, %v514, %v516
        %v519 = vsel %vm517, %v516, %v514
        %v521 = vlaneseq
        %v522 = vshrl.u32 %v521, 7
        %v523 = vsub.s32 0, %v522
        %v524 = vrot.slane %v464, %v523
        %v525 = vlaneseq
        %v526 = vshrl.u32 %v525, 7
        %v527 = vsub.s32 1, %v526
        %v528 = vrot.slane %v464, %v527
        %v531 = vmul.f32 %v518, %v524
        %v532 = vmul.f32 %v519, %v528
        %533 = vrot.lane.b32.xlu0 %v511, 16
        %v534 = vpop.permute.xlu0 %533
        %535 = vrot.lane.b32.xlu0 %v512, 16
        %v536 = vpop.permute.xlu0 %535
        %vm537 = vcmp.lt.s32.totalorder %v472, 16
        %v538 = vsel %vm537, %v534, %v536
        %v539 = vsel %vm537, %v536, %v534
        %v541 = vlaneseq
        %v542 = vshrl.u32 %v541, 7
        %v543 = vsub.s32 0, %v542
        %v544 = vrot.slane %v466, %v543
        %v545 = vlaneseq
        %v546 = vshrl.u32 %v545, 7
        %v547 = vsub.s32 1, %v546
        %v548 = vrot.slane %v466, %v547
        %v551 = vmul.f32 %v539, %v544
        %v552 = vmul.f32 %v538, %v548
        %v553 = vadd.f32 %v511, %v531
        %v554 = vadd.f32 %v512, %v532
        %v555 = vadd.f32 %v553, %v551
        %v556 = vadd.f32 %v554, %v552
        %v557 = vld [vmem:[%s5] sm:$0xff]
        %v558 = vlaneseq
        %v559 = vshrl.u32 %v558, 7
        %v560 = vld [vmem:[%s384] ss:$2 sm:$0x3]
        %v562 = vlaneseq
        %v563 = vshrl.u32 %v562, 7
        %v564 = vsub.s32 0, %v563
        %v565 = vrot.slane %v560, %v564
        %v566 = vlaneseq
        %v567 = vshrl.u32 %v566, 7
        %v568 = vsub.s32 1, %v567
        %v569 = vrot.slane %v560, %v568
        %572 = vrot.lane.b32.xlu0 %v565, 127
        %v573 = vpop.permute.xlu0 %572
        %574 = vrot.lane.b32.xlu0 %v569, 127
        %v575 = vpop.permute.xlu0 %574
        %v576 = vsel %vm473, %v573, %v575
        %v577 = vsel %vm473, %v575, %v573
        %v578 = vmul.f32 %v576, %v480
        %v579 = vmul.f32 %v577, %v484
        %580 = vrot.lane.b32.xlu0 %v565, 1
        %v581 = vpop.permute.xlu0 %580
        %582 = vrot.lane.b32.xlu0 %v569, 1
        %v583 = vpop.permute.xlu0 %582
        %v584 = vsel %vm493, %v581, %v583
        %v585 = vsel %vm493, %v583, %v581
        %v586 = vmul.f32 %v585, %v500
        %v587 = vmul.f32 %v584, %v504
        %v590 = vcombine.low %v578, %v579
        %v592 = vunpack.c.l.s4 1966171168
        %v593 = vunpack.c.0.s8 %v592
        %v594 = vlaneseq
        %v595 = vshrl.u32 %v594, 7
        %v596 = vsub.s32 %v593, %v595
        %v597 = vrot.slane %v590, %v596
        %v599 = vunpack.c.l.s4 1966171168
        %v600 = vunpack.c.0.s8 %v599
        %v601 = vlaneseq
        %v602 = vshrl.u32 %v601, 7
        %v603 = vsub.s32 %v600, %v602
        %v604 = vrot.slane %v597, %v603
        %v606 = vadd.f32 %v560, %v604
        %v609 = vcombine.low %v586, %v587
        %v611 = vunpack.c.l.s4 1966171168
        %v612 = vunpack.c.0.s8 %v611
        %v613 = vlaneseq
        %v614 = vshrl.u32 %v613, 7
        %v615 = vsub.s32 %v612, %v614
        %v616 = vrot.slane %v609, %v615
        %v618 = vunpack.c.l.s4 1966171168
        %v619 = vunpack.c.0.s8 %v618
        %v620 = vlaneseq
        %v621 = vshrl.u32 %v620, 7
        %v622 = vsub.s32 %v619, %v621
        %v623 = vrot.slane %v616, %v622
        %v625 = vadd.f32 %v606, %v623
        %v627 = vlaneseq
        %v628 = vshrl.u32 %v627, 7
        %v629 = vsub.s32 0, %v628
        %v630 = vrot.slane %v625, %v629
        %v631 = vlaneseq
        %v632 = vshrl.u32 %v631, 7
        %v633 = vsub.s32 1, %v632
        %v634 = vrot.slane %v625, %v633
        %637 = vrot.lane.b32.xlu0 %v630, 112
        %v638 = vpop.permute.xlu0 %637
        %639 = vrot.lane.b32.xlu0 %v634, 112
        %v640 = vpop.permute.xlu0 %639
        %v641 = vsel %vm517, %v638, %v640
        %v642 = vsel %vm517, %v640, %v638
        %v643 = vmul.f32 %v641, %v524
        %v644 = vmul.f32 %v642, %v528
        %645 = vrot.lane.b32.xlu0 %v630, 16
        %v646 = vpop.permute.xlu0 %645
        %647 = vrot.lane.b32.xlu0 %v634, 16
        %v648 = vpop.permute.xlu0 %647
        %v649 = vsel %vm537, %v646, %v648
        %v650 = vsel %vm537, %v648, %v646
        %v651 = vmul.f32 %v650, %v544
        %v652 = vmul.f32 %v649, %v548
        %v655 = vcombine.low %v643, %v644
        %v657 = vunpack.c.l.s4 1966171168
        %v658 = vunpack.c.0.s8 %v657
        %v659 = vlaneseq
        %v660 = vshrl.u32 %v659, 7
        %v661 = vsub.s32 %v658, %v660
        %v662 = vrot.slane %v655, %v661
        %v664 = vunpack.c.l.s4 1966171168
        %v665 = vunpack.c.0.s8 %v664
        %v666 = vlaneseq
        %v667 = vshrl.u32 %v666, 7
        %v668 = vsub.s32 %v665, %v667
        %v669 = vrot.slane %v662, %v668
        %v671 = vadd.f32 %v625, %v669
        %v674 = vcombine.low %v651, %v652
        %v676 = vunpack.c.l.s4 1966171168
        %v677 = vunpack.c.0.s8 %v676
        %v678 = vlaneseq
        %v679 = vshrl.u32 %v678, 7
        %v680 = vsub.s32 %v677, %v679
        %v681 = vrot.slane %v674, %v680
        %v683 = vunpack.c.l.s4 1966171168
        %v684 = vunpack.c.0.s8 %v683
        %v685 = vlaneseq
        %v686 = vshrl.u32 %v685, 7
        %v687 = vsub.s32 %v684, %v686
        %v688 = vrot.slane %v681, %v687
        %v690 = vadd.f32 %v671, %v688
        %s691 = scalar_lea.vmem %s384, 1 [#allocation9]
        %v692 = vld [vmem:[%s691] ss:$2 sm:$0x3]
        %v694 = vlaneseq
        %v695 = vshrl.u32 %v694, 7
        %v696 = vsub.s32 0, %v695
        %v697 = vrot.slane %v692, %v696
        %v698 = vlaneseq
        %v699 = vshrl.u32 %v698, 7
        %v700 = vsub.s32 1, %v699
        %v701 = vrot.slane %v692, %v700
        %704 = vrot.lane.b32.xlu0 %v697, 127
        %v705 = vpop.permute.xlu0 %704
        %706 = vrot.lane.b32.xlu0 %v701, 127
        %v707 = vpop.permute.xlu0 %706
        %v708 = vsel %vm473, %v705, %v707
        %v709 = vsel %vm473, %v707, %v705
        %v710 = vmul.f32 %v708, %v480
        %v711 = vmul.f32 %v709, %v484
        %712 = vrot.lane.b32.xlu0 %v697, 1
        %v713 = vpop.permute.xlu0 %712
        %714 = vrot.lane.b32.xlu0 %v701, 1
        %v715 = vpop.permute.xlu0 %714
        %v716 = vsel %vm493, %v713, %v715
        %v717 = vsel %vm493, %v715, %v713
        %v718 = vmul.f32 %v717, %v500
        %v719 = vmul.f32 %v716, %v504
        %v722 = vcombine.low %v710, %v711
        %v724 = vunpack.c.l.s4 1966171168
        %v725 = vunpack.c.0.s8 %v724
        %v726 = vlaneseq
        %v727 = vshrl.u32 %v726, 7
        %v728 = vsub.s32 %v725, %v727
        %v729 = vrot.slane %v722, %v728
        %v731 = vunpack.c.l.s4 1966171168
        %v732 = vunpack.c.0.s8 %v731
        %v733 = vlaneseq
        %v734 = vshrl.u32 %v733, 7
        %v735 = vsub.s32 %v732, %v734
        %v736 = vrot.slane %v729, %v735
        %v738 = vadd.f32 %v692, %v736
        %v741 = vcombine.low %v718, %v719
        %v743 = vunpack.c.l.s4 1966171168
        %v744 = vunpack.c.0.s8 %v743
        %v745 = vlaneseq
        %v746 = vshrl.u32 %v745, 7
        %v747 = vsub.s32 %v744, %v746
        %v748 = vrot.slane %v741, %v747
        %v750 = vunpack.c.l.s4 1966171168
        %v751 = vunpack.c.0.s8 %v750
        %v752 = vlaneseq
        %v753 = vshrl.u32 %v752, 7
        %v754 = vsub.s32 %v751, %v753
        %v755 = vrot.slane %v748, %v754
        %v757 = vadd.f32 %v738, %v755
        %v759 = vlaneseq
        %v760 = vshrl.u32 %v759, 7
        %v761 = vsub.s32 0, %v760
        %v762 = vrot.slane %v757, %v761
        %v763 = vlaneseq
        %v764 = vshrl.u32 %v763, 7
        %v765 = vsub.s32 1, %v764
        %v766 = vrot.slane %v757, %v765
        %769 = vrot.lane.b32.xlu0 %v762, 112
        %v770 = vpop.permute.xlu0 %769
        %771 = vrot.lane.b32.xlu0 %v766, 112
        %v772 = vpop.permute.xlu0 %771
        %v773 = vsel %vm517, %v770, %v772
        %v774 = vsel %vm517, %v772, %v770
        %v775 = vmul.f32 %v773, %v524
        %v776 = vmul.f32 %v774, %v528
        %777 = vrot.lane.b32.xlu0 %v762, 16
        %v778 = vpop.permute.xlu0 %777
        %779 = vrot.lane.b32.xlu0 %v766, 16
        %v780 = vpop.permute.xlu0 %779
        %v781 = vsel %vm537, %v778, %v780
        %v782 = vsel %vm537, %v780, %v778
        %v783 = vmul.f32 %v782, %v544
        %v784 = vmul.f32 %v781, %v548
        %v787 = vcombine.low %v775, %v776
        %v789 = vunpack.c.l.s4 1966171168
        %v790 = vunpack.c.0.s8 %v789
        %v791 = vlaneseq
        %v792 = vshrl.u32 %v791, 7
        %v793 = vsub.s32 %v790, %v792
        %v794 = vrot.slane %v787, %v793
        %v796 = vunpack.c.l.s4 1966171168
        %v797 = vunpack.c.0.s8 %v796
        %v798 = vlaneseq
        %v799 = vshrl.u32 %v798, 7
        %v800 = vsub.s32 %v797, %v799
        %v801 = vrot.slane %v794, %v800
        %v803 = vadd.f32 %v757, %v801
        %v806 = vcombine.low %v783, %v784
        %v808 = vunpack.c.l.s4 1966171168
        %v809 = vunpack.c.0.s8 %v808
        %v810 = vlaneseq
        %v811 = vshrl.u32 %v810, 7
        %v812 = vsub.s32 %v809, %v811
        %v813 = vrot.slane %v806, %v812
        %v815 = vunpack.c.l.s4 1966171168
        %v816 = vunpack.c.0.s8 %v815
        %v817 = vlaneseq
        %v818 = vshrl.u32 %v817, 7
        %v819 = vsub.s32 %v816, %v818
        %v820 = vrot.slane %v813, %v819
        %v822 = vadd.f32 %v803, %v820
        %vm823 = vcmp.le.s32.totalorder %v559, 0
        %v824 = vsel %vm823, 1, 0
        %vm825 = vcmp.eq.s32.totalorder %v824, 1
        %v827 = vlaneseq
        %v828 = vshrl.u32 %v827, 7
        %v829 = vsub.s32 0, %v828
        %v830 = vrot.slane %v690, %v829
        %v831 = vlaneseq
        %v832 = vshrl.u32 %v831, 7
        %v833 = vsub.s32 1, %v832
        %v834 = vrot.slane %v690, %v833
        %v837 = vsel %vm825, %v830, 0.0
        %v838 = vsel %vm825, %v834, 0.0
        %vm839 = vcmask 64512
        %v841 = vsel %vm839, %v557, 0
        %843 = vmatprep.subr.mxu0 %v556
        %844 = vmatpush1.msra.mxu0 %v555
        %845 = vmatprep.subr.mxu0 0.0
        %846 = vmatpush1.msra.mxu0 0.0
        %847 = vmatprep.subr.mxu0 0.0
        %848 = vmatpush1.msra.mxu0 0.0
        %849 = vmatprep.subr.mxu0 0.0
        %850 = vmatpush1.msra.mxu0 0.0
        %851 = vmatprep.subr.mxu0 0.0
        %852 = vmatpush1.msra.mxu0 0.0
        %853 = vmatprep.subr.mxu0 0.0
        %854 = vmatpush1.msra.mxu0 0.0
        %855 = vmatprep.subr.mxu0 0.0
        %856 = vmatpush1.msra.mxu0 0.0
        %857 = vmatprep.subr.mxu0 0.0
        %858 = vmatpush1.msra.mxu0 0.0
        %859 = vmatprep.subr.mxu0 0.0
        %860 = vmatpush1.msra.mxu0 0.0
        %861 = vmatprep.subr.mxu0 0.0
        %862 = vmatpush1.msra.mxu0 0.0
        %863 = vmatprep.subr.mxu0 0.0
        %864 = vmatpush1.msra.mxu0 0.0
        %865 = vmatprep.subr.mxu0 0.0
        %866 = vmatpush1.msra.mxu0 0.0
        %867 = vmatprep.subr.mxu0 0.0
        %868 = vmatpush1.msra.mxu0 0.0
        %869 = vmatprep.subr.mxu0 0.0
        %870 = vmatpush1.msra.mxu0 0.0
        %871 = vmatprep.subr.mxu0 0.0
        %872 = vmatpush1.msra.mxu0 0.0
        %873 = vmatprep.subr.mxu0 0.0
        %874 = vmatpush1.msra.mxu0 0.0
        %875 = vmatprep.subr.mxu0 0.0
        %876 = vmatpush1.msra.mxu0 0.0
        %877 = vmatprep.subr.mxu0 0.0
        %878 = vmatpush1.msra.mxu0 0.0
        %879 = vmatprep.subr.mxu0 0.0
        %880 = vmatpush1.msra.mxu0 0.0
        %881 = vmatprep.subr.mxu0 0.0
        %882 = vmatpush1.msra.mxu0 0.0
        %883 = vmatprep.subr.mxu0 0.0
        %884 = vmatpush1.msra.mxu0 0.0
        %885 = vmatprep.subr.mxu0 0.0
        %886 = vmatpush1.msra.mxu0 0.0
        %887 = vmatprep.subr.mxu0 0.0
        %888 = vmatpush1.msra.mxu0 0.0
        %889 = vmatprep.subr.mxu0 0.0
        %890 = vmatpush1.msra.mxu0 0.0
        %891 = vmatprep.subr.mxu0 0.0
        %892 = vmatpush1.msra.mxu0 0.0
        %893 = vmatprep.subr.mxu0 0.0
        %894 = vmatpush1.msra.mxu0 0.0
        %895 = vmatprep.subr.mxu0 0.0
        %896 = vmatpush1.msra.mxu0 0.0
        %897 = vmatprep.subr.mxu0 0.0
        %898 = vmatpush1.msra.mxu0 0.0
        %899 = vmatprep.subr.mxu0 0.0
        %900 = vmatpush1.msra.mxu0 0.0
        %901 = vmatprep.subr.mxu0 0.0
        %902 = vmatpush1.msra.mxu0 0.0
        %903 = vmatprep.subr.mxu0 0.0
        %904 = vmatpush1.msra.mxu0 0.0
        %905 = vmatprep.subr.mxu0 0.0
        %906 = vmatpush1.msra.mxu0 0.0
        %907 = vmatprep.mubr.f32.mxu0 0.0
        %908 = vmatmul.mubr.f32.gmra.mrb[0].mxu0 %v841
        %v909 = vpop.f32.mrb[0].mxu0
        %v910 = vadd.f32 %v837, %v909
        %v911 = vpop.f32.mrb[0].mxu0
        %v912 = vadd.f32 %v838, %v911
        %913 = vdwg.mxu0
        %vm914 = vcmp.ge.s32.totalorder %v559, 7
        %v915 = vsel %vm914, 1, 0
        %vm916 = vcmp.eq.s32.totalorder %v915, 1
        %v918 = vlaneseq
        %v919 = vshrl.u32 %v918, 7
        %v920 = vsub.s32 0, %v919
        %v921 = vrot.slane %v822, %v920
        %v922 = vlaneseq
        %v923 = vshrl.u32 %v922, 7
        %v924 = vsub.s32 1, %v923
        %v925 = vrot.slane %v822, %v924
        %v928 = vsel %vm916, %v921, 0.0
        %v929 = vsel %vm916, %v925, 0.0
        %v930 = vadd.f32 %v910, %v928
        %v931 = vadd.f32 %v912, %v929
        %v932 = vmul.f32 %v930, 0.037037037
        %v933 = vmul.f32 %v931, 0.037037037
        %vm934 = vcmp.ge.f32.partialorder %v932, 1e-07
        %vm935 = vcmp.ge.f32.partialorder %v933, 1e-07
        %vm936 = vcmp.le.f32.partialorder %v932, 0.9999999
        %vm937 = vcmp.le.f32.partialorder %v933, 0.9999999
        %vm938 = vmand %vm934, %vm936
        %vm939 = vmand %vm935, %vm937
        %v940 = vld [vmem:[#allocation2] sm:$0xff]
        %v941 = vld [vmem:[#allocation2 + $0x8] sm:$0xff]
        %v942 = vsel %vm938, 1, 0
        %v943 = vsel %vm939, 1, 0
        %v944 = vcvt.s32.f32 %v942
        %v945 = vcvt.s32.f32 %v943
        %v946 = vmax.f32 %v940, %v944
        %v947 = vmax.f32 %v941, %v945
        %948 = vst [vmem:[#allocation2] sm:$0xff] %v946
        %949 = vst [vmem:[#allocation2 + $0x8] sm:$0xff] %v947
        %p950 = scmp.eq.s32.totalorder %s36, 3
        // Predicated region
        $region65: #{tpu_custom_call.1} parent=43 // pred_check
          %p951 = pneg %p950
        $region66: #{tpu_custom_call.1} parent=43 // pred_check_branch
          %953 = sbr.rel (%p951) target = $region68
        $region67: #{tpu_custom_call.1} parent=43 // pred_region
          %v954 = vld [vmem:[%s427] sm:$0xff]
          %v955 = vld [vmem:[%s427 + $0x8] sm:$0xff]
          %v956 = vld [vmem:[#allocation2] sm:$0xff]
          %v957 = vld [vmem:[#allocation2 + $0x8] sm:$0xff]
          %v958 = vmul.f32 %v956, 10.0
          %v959 = vmul.f32 %v957, 10.0
          %v960 = vmul.f32 %v958, %v954
          %v961 = vmul.f32 %v959, %v955
          %v962 = vadd.f32 %v954, %v960
          %v963 = vadd.f32 %v955, %v961
          %v964 = vmul.f32 %v962, 0.25
          %v965 = vmul.f32 %v963, 0.25
          %966 = vst [vmem:[%s427] sm:$0xff] %v964
          %967 = vst [vmem:[%s427 + $0x8] sm:$0xff] %v965
        $region68: #{tpu_custom_call.1} parent=43 // pred_fallthru
          _
        %s968 = sand.u32 %s218, 1
        %s969 = scalar_lea.sflag [#allocation5], %s968
        %s970 = sand.u32 %s218, 1
        %s971 = smul.addr %s970, 16
        %s972 = scalar_lea.vmem [#allocation11], %s971
        // Predicated region
        $region69: #{tpu_custom_call.1} parent=43 // pred_check
          %p973 = pneg %p228
        $region70: #{tpu_custom_call.1} parent=43 // pred_check_branch
          %975 = sbr.rel (%p973) target = $region72
        $region71: #{tpu_custom_call.1} parent=43 // pred_region
          %s977 = ssub.s32 256, 256
          %978 = vsyncadd %s969, %s977
          %s979 = smul.addr %s35, 2
          %s980 = smul.addr %s34, 4
          %s981 = sadd.s32 %s979, %s980
          %s982 = smul.addr %s981, 128
          %s983 = scalar_lea.hbm %s6, %s982
          %s985 = sshll.u32 %s972, 4
          %s986 = int_to_ptr.vmem [resolvable:$true] %s985
          %988 = dma.vmem_to_hbm [thread:$0]  %s986, 256, %s983, %s969
        $region72: #{tpu_custom_call.1} parent=43 // pred_fallthru
          _
      $region44: #{tpu_custom_call.1} parent=5 // pred_fallthru
        _
      %p989 = scmp.le.s32.totalorder 2, %s24
      // Predicated region
      $region73: #{tpu_custom_call.1} parent=5 // pred_check
        %p990 = pneg %p989
      $region74: #{tpu_custom_call.1} parent=5 // pred_check_branch
        %992 = sbr.rel (%p990) target = $region76
      $region75: #{tpu_custom_call.1} parent=5 // pred_region
        %s993 = ssub.s32 %s24, 2
        // Predicated region
        $region77: #{tpu_custom_call.1} parent=75 // pred_check
          %p994 = pneg %p234
        $region78: #{tpu_custom_call.1} parent=75 // pred_check_branch
          %996 = sbr.rel (%p994) target = $region80
        $region79: #{tpu_custom_call.1} parent=75 // pred_region
          %s997 = sand.u32 %s219, 1
          %s998 = scalar_lea.sflag [#allocation5], %s997
          %s999 = sand.u32 %s219, 1
          %s1000 = smul.addr %s999, 16
          %s1001 = scalar_lea.vmem [#allocation11], %s1000
          %1002 = dma.done %s998, 256
        $region80: #{tpu_custom_call.1} parent=75 // pred_fallthru
          _
      $region76: #{tpu_custom_call.1} parent=5 // pred_fallthru
        _
    $region6: #{tpu_custom_call.1} parent=1 // loop_footer
      %s28 = sadd.s32 1, %s24
    $region7: #{tpu_custom_call.1} parent=1 // loop_footer_branch
      %23 = sbr.rel target = $region3
    $region8: #{tpu_custom_call.1} parent=1 // loop_exit
      _
    %1003 = vsyncpa [#allocation4], 1
    %s1004 = scalar_lea.sflag [#allocation4], 1
    %1005 = vsyncpa %s1004, 1
    %1006 = vsyncpa [#allocation7], 1
    %s1007 = scalar_lea.sflag [#allocation7], 1
    %1008 = vsyncpa %s1007, 1
    %1009 = vsyncpa [#allocation10], 1
    %s1010 = scalar_lea.sflag [#allocation10], 1
    %1011 = vsyncpa %s1010, 1
    %1012 = vsyncpa [#allocation5], 1
    %s1013 = scalar_lea.sflag [#allocation5], 1
    %1014 = vsyncpa %s1013, 1

</llo_original>
